<compile_context>
chip_gen: v7x
topology: tpu7x:2x2x1
jax: 0.10.0
libtpu: 0.0.40
codegen_flags: <defaults>
</compile_context>

<pallas_src>
import functools

import jax
import jax.numpy as jnp
import numpy as np
from jax.experimental import pallas as pl
from jax.experimental.pallas import tpu as pltpu


# ------------------------------- Pallas kernel ------------------------------ #
def _gcn_fused_kernel(x_ref, a_ref, w_ref, b_ref, o_ref):
    """One grid step: one lane tile of N*L and one input channel c.

    x_ref : (1, V, T)        this channel's vertex slab
    a_ref : (S*V, V)         stacked transposed supports [A_0^T; A_1^T; ...]
    w_ref : (1, K*Co, 1, 1)  weight columns for this channel, chunk-major:
                             w_ref[0, k*Co + o] = weight[o, k*C + c]
    b_ref : (Co, 1, 1)       bias
    o_ref : (Co, V, T)       output block, resident across the c grid axis
    """
    _, V, _ = x_ref.shape
    S = a_ref.shape[0] // V
    Co = b_ref.shape[0]
    K = w_ref.shape[1] // Co            # number of concatenated chunks
    order = (K - 1) // S

    c = pl.program_id(1)

    @pl.when(c == 0)
    def _init():                        # initialise resident output with bias
        o_ref[...] = jnp.broadcast_to(b_ref[...], o_ref.shape)

    x_c = x_ref[0]                      # (V, T)

    def w_col(col):                     # (Co, 1, 1) weight column for chunk `col`
        return w_ref[0, col * Co:(col + 1) * Co]

    # chunk 0: the identity term (x itself)
    acc = w_col(0) * x_c                # (Co, 1, 1) * (V, T) -> (Co, V, T)

    # first-order diffusion for ALL supports in a single MXU call
    first = jnp.dot(a_ref[...], x_c, preferred_element_type=jnp.float32)  # (S*V, T)

    for s in range(S):
        a_s = a_ref[s * V:(s + 1) * V, :]        # (V, V) == A_s^T
        cur = first[s * V:(s + 1) * V]           # (V, T) == A_s^T x
        acc = acc + w_col(1 + s * order) * cur
        for p in range(1, order):                # chained higher orders, in VMEM
            cur = jnp.dot(a_s, cur, preferred_element_type=jnp.float32)
            acc = acc + w_col(1 + s * order + p) * cur

    o_ref[...] += acc


# --------------------------------- wrapper ---------------------------------- #
def _choose_lane_tile(B, target=512):
    if B <= target:
        return B, B                      # single full-width tile
    t = max(128, (target // 128) * 128)  # 128-aligned lane tile
    Bp = ((B + t - 1) // t) * t
    return t, Bp


@functools.partial(jax.jit, static_argnames=("order", "lane_tile"))
def gcn_forward(x, support, weight, bias, order=2, lane_tile=512):
    """Pallas-fused equivalent of gcn.forward (inference)."""
    N, C, V, L = x.shape
    S = len(support)
    Co, Ci_total = weight.shape
    K = order * S + 1
    assert Ci_total == K * C, (Ci_total, K, C)

    B = N * L
    T, Bp = _choose_lane_tile(B, lane_tile)
    grid_b = Bp // T

    # ---- one-time host-side re-layouts (only full-tensor transposes left) ----
    x_r = jnp.transpose(x, (1, 2, 0, 3)).reshape(C, V, B)      # (C, V, N*L)
    if Bp != B:
        x_r = jnp.pad(x_r, ((0, 0), (0, 0), (0, Bp - B)))
    a_all = jnp.concatenate([a.T for a in support], axis=0)    # (S*V, V), A^T hoisted
    # w_r[c, k*Co + o, 0, 0] == weight[o, k*C + c]
    w_r = weight.reshape(Co, K, C).transpose(2, 1, 0).reshape(C, K * Co, 1, 1)
    b_r = bias.reshape(Co, 1, 1)

    flops = 2 * S * order * V * V * C * Bp + 2 * K * C * Co * V * Bp
    bytes_accessed = 4 * (C * V * Bp + S * V * V + C * K * Co + Co + Co * V * Bp)

    out_r = pl.pallas_call(
        _gcn_fused_kernel,
        out_shape=jax.ShapeDtypeStruct((Co, V, Bp), jnp.float32),
        grid=(grid_b, C),
        in_specs=[
            pl.BlockSpec((1, V, T), lambda i, c: (c, 0, i)),             # x slab
            pl.BlockSpec((S * V, V), lambda i, c: (0, 0)),               # supports
            pl.BlockSpec((1, K * Co, 1, 1), lambda i, c: (c, 0, 0, 0)),  # weights
            pl.BlockSpec((Co, 1, 1), lambda i, c: (0, 0, 0)),            # bias
        ],
        out_specs=pl.BlockSpec((Co, V, T), lambda i, c: (0, 0, i)),
        compiler_params=pltpu.CompilerParams(
            dimension_semantics=("parallel", "arbitrary"),
            vmem_limit_bytes=48 * 1024 * 1024,
        ),
        cost_estimate=pl.CostEstimate(
            flops=flops, transcendentals=0, bytes_accessed=bytes_accessed),
    )(x_r, a_all, w_r, b_r)

    out_r = out_r[:, :, :B]                                    # drop lane padding
    # (Co, V, N*L) -> (N, Co, V, L)
    out = jnp.transpose(out_r.reshape(Co, V, N, L), (2, 0, 1, 3))
    # TODO(synk): F.dropout is identity at inference (training=False); no stochastic dropout applied.
    return out


# ----------------------------- plain-JAX reference -------------------------- #
def gcn_reference(x, support, weight, bias, order=2):
    out = [x]
    for a in support:
        x1 = jnp.einsum("ncvl,vw->ncwl", x, a)
        out.append(x1)
        for _ in range(1, order):
            x2 = jnp.einsum("ncvl,vw->ncwl", x1, a)
            out.append(x2)
            x1 = x2
    h = jnp.concatenate(out, axis=1)
    return jnp.einsum("oi,nivl->novl", weight, h) + bias[None, :, None, None]


# ---------------------------------- main ----------------------------------- #
if __name__ == "__main__":
    N, c_in, V, L = 2, 4, 8, 16
    support_len, order = 3, 2
    c_out = 8
    c_in_total = (order * support_len + 1) * c_in  # 28

    key = jax.random.PRNGKey(0)
    kx, ka, kw, kb = jax.random.split(key, 4)

    x = jax.random.normal(kx, (N, c_in, V, L), dtype=jnp.float32)
    support = [
        jax.random.uniform(k, (V, V), dtype=jnp.float32)
        for k in jax.random.split(ka, support_len)
    ]

    # Deterministic Conv2d-style init: U(-1/sqrt(fan_in), 1/sqrt(fan_in)).
    bound = 1.0 / np.sqrt(c_in_total)
    weight = jax.random.uniform(
        kw, (c_out, c_in_total), dtype=jnp.float32, minval=-bound, maxval=bound
    )
    bias = jax.random.uniform(
        kb, (c_out,), dtype=jnp.float32, minval=-bound, maxval=bound
    )

    out = gcn_forward(x, support, weight, bias, order=order)
    out = jax.block_until_ready(out)

    ref = gcn_reference(x, support, weight, bias, order=order)
    assert out.shape == (N, c_out, V, L), out.shape
    np.testing.assert_allclose(np.asarray(out), np.asarray(ref), rtol=1e-3, atol=1e-3)

    print("KERNEL_OK")
</pallas_src>

<mosaic_0001>
module attributes {stable_mosaic.version = 11 : i64} {
  func.func @_gcn_fused_kernel(%arg0: i32, %arg1: i32, %arg2: memref<1x8x32xf32, #tpu.memory_space<vmem>>, %arg3: memref<24x8xf32, #tpu.memory_space<vmem>>, %arg4: memref<1x56x1x1xf32, #tpu.memory_space<vmem>>, %arg5: memref<8x1x1xf32, #tpu.memory_space<vmem>>, %arg6: memref<8x8x32xf32, #tpu.memory_space<vmem>>) attributes {dimension_semantics = [#tpu.dimension_semantics<parallel>, #tpu.dimension_semantics<arbitrary>], iteration_bounds = array<i64: 1, 4>, scalar_prefetch = 0 : i64, scratch_operands = 0 : i64, tpu.core_type = #tpu.core_type<tc>, window_params = [{transform_indices = @transform_0, window_bounds = array<i64: 1, 8, 32>}, {pipeline_mode = #tpu.pipeline_mode<synchronous>, transform_indices = @transform_1, window_bounds = array<i64: 24, 8>}, {transform_indices = @transform_2, window_bounds = array<i64: 1, 56, 1, 1>}, {pipeline_mode = #tpu.pipeline_mode<synchronous>, transform_indices = @transform_3, window_bounds = array<i64: 8, 1, 1>}, {transform_indices = @transform_4, window_bounds = array<i64: 8, 8, 32>}]} {
    %c0_i32 = arith.constant 0 : i32
    %0 = arith.cmpi eq, %arg1, %c0_i32 : i32
    %1 = arith.extui %0 : i1 to i32
    %c0_i32_0 = arith.constant 0 : i32
    %2 = arith.cmpi ne, %1, %c0_i32_0 : i32
    scf.if %2 {
      %c0_42 = arith.constant 0 : index
      %c0_43 = arith.constant 0 : index
      %c0_44 = arith.constant 0 : index
      %67 = vector.load %arg5[%c0_42, %c0_43, %c0_44] : memref<8x1x1xf32, #tpu.memory_space<vmem>>, vector<8x1x1xf32>
      %68 = vector.shape_cast %67 : vector<8x1x1xf32> to vector<8x1x1xf32>
      %69 = vector.broadcast %68 : vector<8x1x1xf32> to vector<8x8x32xf32>
      %c0_45 = arith.constant 0 : index
      %c0_46 = arith.constant 0 : index
      %c0_47 = arith.constant 0 : index
      %70 = vector.load %arg6[%c0_45, %c0_46, %c0_47] : memref<8x8x32xf32, #tpu.memory_space<vmem>>, vector<8x8x32xf32>
      tpu.vector_store %arg6[%c0_45, %c0_46, %c0_47], %69 {strides = array<i32>} : memref<8x8x32xf32, #tpu.memory_space<vmem>>, vector<8x8x32xf32>,
    } else {
    }
    %c0 = arith.constant 0 : index
    %c0_1 = arith.constant 0 : index
    %c0_2 = arith.constant 0 : index
    %3 = vector.load %arg2[%c0, %c0_1, %c0_2] : memref<1x8x32xf32, #tpu.memory_space<vmem>>, vector<1x8x32xf32>
    %4 = vector.shape_cast %3 : vector<1x8x32xf32> to vector<8x32xf32>
    %c0_3 = arith.constant 0 : index
    %c0_4 = arith.constant 0 : index
    %c0_5 = arith.constant 0 : index
    %c0_6 = arith.constant 0 : index
    %5 = vector.load %arg4[%c0_3, %c0_4, %c0_5, %c0_6] : memref<1x56x1x1xf32, #tpu.memory_space<vmem>>, vector<1x8x1x1xf32>
    %6 = vector.shape_cast %5 : vector<1x8x1x1xf32> to vector<8x1x1xf32>
    %7 = vector.shape_cast %4 : vector<8x32xf32> to vector<1x8x32xf32>
    %8 = vector.broadcast %6 : vector<8x1x1xf32> to vector<8x8x32xf32>
    %9 = vector.broadcast %7 : vector<1x8x32xf32> to vector<8x8x32xf32>
    %10 = arith.mulf %8, %9 : vector<8x8x32xf32>
    %c0_7 = arith.constant 0 : index
    %c0_8 = arith.constant 0 : index
    %11 = vector.load %arg3[%c0_7, %c0_8] : memref<24x8xf32, #tpu.memory_space<vmem>>, vector<24x8xf32>
    %cst = arith.constant dense<0.000000e+00> : vector<24x32xf32>
    %12 = tpu.matmul %11, %4, %cst {dimension_numbers = #tpu.dot_dimension_numbers<[1], [0], [0], [1], [0, 0, 1, 1], [], []>} : vector<24x8xf32>, vector<8x32xf32>, vector<24x32xf32> -> vector<24x32xf32>
    %c0_9 = arith.constant 0 : index
    %c0_10 = arith.constant 0 : index
    %13 = vector.load %arg3[%c0_9, %c0_10] : memref<24x8xf32, #tpu.memory_space<vmem>>, vector<8x8xf32>
    %14 = vector.extract_strided_slice %12 {offsets = [0, 0], sizes = [8, 32], strides = [1, 1]} : vector<24x32xf32> to vector<8x32xf32>
    %c0_11 = arith.constant 0 : index
    %c8 = arith.constant 8 : index
    %c0_12 = arith.constant 0 : index
    %c0_13 = arith.constant 0 : index
    %15 = vector.load %arg4[%c0_11, %c8, %c0_12, %c0_13] : memref<1x56x1x1xf32, #tpu.memory_space<vmem>>, vector<1x8x1x1xf32>
    %16 = vector.shape_cast %15 : vector<1x8x1x1xf32> to vector<8x1x1xf32>
    %17 = vector.shape_cast %14 : vector<8x32xf32> to vector<1x8x32xf32>
    %18 = vector.broadcast %16 : vector<8x1x1xf32> to vector<8x8x32xf32>
    %19 = vector.broadcast %17 : vector<1x8x32xf32> to vector<8x8x32xf32>
    %20 = arith.mulf %18, %19 : vector<8x8x32xf32>
    %21 = arith.addf %10, %20 : vector<8x8x32xf32>
    %cst_14 = arith.constant dense<0.000000e+00> : vector<8x32xf32>
    %22 = tpu.matmul %13, %14, %cst_14 {dimension_numbers = #tpu.dot_dimension_numbers<[1], [0], [0], [1], [0, 0, 1, 1], [], []>} : vector<8x8xf32>, vector<8x32xf32>, vector<8x32xf32> -> vector<8x32xf32>
    %c0_15 = arith.constant 0 : index
    %c16 = arith.constant 16 : index
    %c0_16 = arith.constant 0 : index
    %c0_17 = arith.constant 0 : index
    %23 = vector.load %arg4[%c0_15, %c16, %c0_16, %c0_17] : memref<1x56x1x1xf32, #tpu.memory_space<vmem>>, vector<1x8x1x1xf32>
    %24 = vector.shape_cast %23 : vector<1x8x1x1xf32> to vector<8x1x1xf32>
    %25 = vector.shape_cast %22 : vector<8x32xf32> to vector<1x8x32xf32>
    %26 = vector.broadcast %24 : vector<8x1x1xf32> to vector<8x8x32xf32>
    %27 = vector.broadcast %25 : vector<1x8x32xf32> to vector<8x8x32xf32>
    %28 = arith.mulf %26, %27 : vector<8x8x32xf32>
    %29 = arith.addf %21, %28 : vector<8x8x32xf32>
    %c8_18 = arith.constant 8 : index
    %c0_19 = arith.constant 0 : index
    %30 = vector.load %arg3[%c8_18, %c0_19] : memref<24x8xf32, #tpu.memory_space<vmem>>, vector<8x8xf32>
    %31 = vector.extract_strided_slice %12 {offsets = [8, 0], sizes = [8, 32], strides = [1, 1]} : vector<24x32xf32> to vector<8x32xf32>
    %c0_20 = arith.constant 0 : index
    %c24 = arith.constant 24 : index
    %c0_21 = arith.constant 0 : index
    %c0_22 = arith.constant 0 : index
    %32 = vector.load %arg4[%c0_20, %c24, %c0_21, %c0_22] : memref<1x56x1x1xf32, #tpu.memory_space<vmem>>, vector<1x8x1x1xf32>
    %33 = vector.shape_cast %32 : vector<1x8x1x1xf32> to vector<8x1x1xf32>
    %34 = vector.shape_cast %31 : vector<8x32xf32> to vector<1x8x32xf32>
    %35 = vector.broadcast %33 : vector<8x1x1xf32> to vector<8x8x32xf32>
    %36 = vector.broadcast %34 : vector<1x8x32xf32> to vector<8x8x32xf32>
    %37 = arith.mulf %35, %36 : vector<8x8x32xf32>
    %38 = arith.addf %29, %37 : vector<8x8x32xf32>
    %cst_23 = arith.constant dense<0.000000e+00> : vector<8x32xf32>
    %39 = tpu.matmul %30, %31, %cst_23 {dimension_numbers = #tpu.dot_dimension_numbers<[1], [0], [0], [1], [0, 0, 1, 1], [], []>} : vector<8x8xf32>, vector<8x32xf32>, vector<8x32xf32> -> vector<8x32xf32>
    %c0_24 = arith.constant 0 : index
    %c32 = arith.constant 32 : index
    %c0_25 = arith.constant 0 : index
    %c0_26 = arith.constant 0 : index
    %40 = vector.load %arg4[%c0_24, %c32, %c0_25, %c0_26] : memref<1x56x1x1xf32, #tpu.memory_space<vmem>>, vector<1x8x1x1xf32>
    %41 = vector.shape_cast %40 : vector<1x8x1x1xf32> to vector<8x1x1xf32>
    %42 = vector.shape_cast %39 : vector<8x32xf32> to vector<1x8x32xf32>
    %43 = vector.broadcast %41 : vector<8x1x1xf32> to vector<8x8x32xf32>
    %44 = vector.broadcast %42 : vector<1x8x32xf32> to vector<8x8x32xf32>
    %45 = arith.mulf %43, %44 : vector<8x8x32xf32>
    %46 = arith.addf %38, %45 : vector<8x8x32xf32>
    %c16_27 = arith.constant 16 : index
    %c0_28 = arith.constant 0 : index
    %47 = vector.load %arg3[%c16_27, %c0_28] : memref<24x8xf32, #tpu.memory_space<vmem>>, vector<8x8xf32>
    %48 = vector.extract_strided_slice %12 {offsets = [16, 0], sizes = [8, 32], strides = [1, 1]} : vector<24x32xf32> to vector<8x32xf32>
    %c0_29 = arith.constant 0 : index
    %c40 = arith.constant 40 : index
    %c0_30 = arith.constant 0 : index
    %c0_31 = arith.constant 0 : index
    %49 = vector.load %arg4[%c0_29, %c40, %c0_30, %c0_31] : memref<1x56x1x1xf32, #tpu.memory_space<vmem>>, vector<1x8x1x1xf32>
    %50 = vector.shape_cast %49 : vector<1x8x1x1xf32> to vector<8x1x1xf32>
    %51 = vector.shape_cast %48 : vector<8x32xf32> to vector<1x8x32xf32>
    %52 = vector.broadcast %50 : vector<8x1x1xf32> to vector<8x8x32xf32>
    %53 = vector.broadcast %51 : vector<1x8x32xf32> to vector<8x8x32xf32>
    %54 = arith.mulf %52, %53 : vector<8x8x32xf32>
    %55 = arith.addf %46, %54 : vector<8x8x32xf32>
    %cst_32 = arith.constant dense<0.000000e+00> : vector<8x32xf32>
    %56 = tpu.matmul %47, %48, %cst_32 {dimension_numbers = #tpu.dot_dimension_numbers<[1], [0], [0], [1], [0, 0, 1, 1], [], []>} : vector<8x8xf32>, vector<8x32xf32>, vector<8x32xf32> -> vector<8x32xf32>
    %c0_33 = arith.constant 0 : index
    %c48 = arith.constant 48 : index
    %c0_34 = arith.constant 0 : index
    %c0_35 = arith.constant 0 : index
    %57 = vector.load %arg4[%c0_33, %c48, %c0_34, %c0_35] : memref<1x56x1x1xf32, #tpu.memory_space<vmem>>, vector<1x8x1x1xf32>
    %58 = vector.shape_cast %57 : vector<1x8x1x1xf32> to vector<8x1x1xf32>
    %59 = vector.shape_cast %56 : vector<8x32xf32> to vector<1x8x32xf32>
    %60 = vector.broadcast %58 : vector<8x1x1xf32> to vector<8x8x32xf32>
    %61 = vector.broadcast %59 : vector<1x8x32xf32> to vector<8x8x32xf32>
    %62 = arith.mulf %60, %61 : vector<8x8x32xf32>
    %63 = arith.addf %55, %62 : vector<8x8x32xf32>
    %c0_36 = arith.constant 0 : index
    %c0_37 = arith.constant 0 : index
    %c0_38 = arith.constant 0 : index
    %64 = vector.load %arg6[%c0_36, %c0_37, %c0_38] : memref<8x8x32xf32, #tpu.memory_space<vmem>>, vector<8x8x32xf32>
    %65 = arith.addf %64, %63 : vector<8x8x32xf32>
    %c0_39 = arith.constant 0 : index
    %c0_40 = arith.constant 0 : index
    %c0_41 = arith.constant 0 : index
    %66 = vector.load %arg6[%c0_39, %c0_40, %c0_41] : memref<8x8x32xf32, #tpu.memory_space<vmem>>, vector<8x8x32xf32>
    tpu.vector_store %arg6[%c0_39, %c0_40, %c0_41], %65 {strides = array<i32>} : memref<8x8x32xf32, #tpu.memory_space<vmem>>, vector<8x8x32xf32>,
    return
  }
  func.func @transform_0(%arg0: i32, %arg1: i32) -> (i32, i32, i32) {
    %c0_i32 = arith.constant 0 : i32
    %c0_i32_0 = arith.constant 0 : i32
    return %arg1, %c0_i32, %arg0 : i32, i32, i32
  }
  func.func @transform_1(%arg0: i32, %arg1: i32) -> (i32, i32) {
    %c0_i32 = arith.constant 0 : i32
    %c0_i32_0 = arith.constant 0 : i32
    %c0_i32_1 = arith.constant 0 : i32
    return %c0_i32, %c0_i32_0 : i32, i32
  }
  func.func @transform_2(%arg0: i32, %arg1: i32) -> (i32, i32, i32, i32) {
    %c0_i32 = arith.constant 0 : i32
    %c0_i32_0 = arith.constant 0 : i32
    %c0_i32_1 = arith.constant 0 : i32
    %c0_i32_2 = arith.constant 0 : i32
    return %arg1, %c0_i32, %c0_i32_0, %c0_i32_1 : i32, i32, i32, i32
  }
  func.func @transform_3(%arg0: i32, %arg1: i32) -> (i32, i32, i32) {
    %c0_i32 = arith.constant 0 : i32
    %c0_i32_0 = arith.constant 0 : i32
    %c0_i32_1 = arith.constant 0 : i32
    %c0_i32_2 = arith.constant 0 : i32
    return %c0_i32, %c0_i32_0, %c0_i32_1 : i32, i32, i32
  }
  func.func @transform_4(%arg0: i32, %arg1: i32) -> (i32, i32, i32) {
    %c0_i32 = arith.constant 0 : i32
    %c0_i32_0 = arith.constant 0 : i32
    %c0_i32_1 = arith.constant 0 : i32
    return %c0_i32, %c0_i32_0, %arg0 : i32, i32, i32
  }
}

</mosaic_0001>

<llo_original>
// kernel: gcn_forward.1
$region0: #{gcn_forward.1}
  #allocation0 [shape = 'u32[]', space=smem, size = 0x4, offset = 0x4, fixed_abs, tag = 'smem constant byte address 0x4 - core index']
  #allocation1 [shape = 'u32[144,128]{1,0:T(1,128)}', space=vmem, size = 0x12000, scoped, tag = 'internal scratch']
  %s0 = inlined_call_operand.vmem [shape: f32[4,8,32], index: 0, kind: input, shape index: {}]
  %s1 = inlined_call_operand.vmem [shape: f32[24,8], index: 1, kind: input, shape index: {}]
  %s2 = inlined_call_operand.vmem [shape: f32[4,56,1,1], index: 2, kind: input, shape index: {}]
  %s3 = inlined_call_operand.vmem [shape: f32[8,1,1], index: 3, kind: input, shape index: {}]
  %s4 = inlined_call_operand.vmem [shape: f32[8,8,32], index: 4, kind: output, shape index: {}]
  %s5 = sld [smem:[#allocation0]]
  $region53: #{gcn_forward.1} parent=0
    _
  %s7 = ssub.s32 1, %s5
  %s8 = scalar_select 0, %s7, %s5
  loop: start=0, step=1, limit=6
  $region2: #{gcn_forward.1} parent=0 // loop_pre_header
    _
  $region3: #{gcn_forward.1} parent=0 // loop_header
    %s10 = sphi 0, %s14
    %p11 = scmp.ge.s32.totalorder %s10, 6
    %s17 = sphi 0, %s29
    %s18 = sphi 0, %s25
    %s19 = sphi 0, %s17
    %s20 = sphi 0, %s18
    %s21 = sphi 0, %s19
    %s22 = sphi 0, %s20
    %s34 = sphi 0, %s36
    %s37 = sphi 0, %s34
    %s38 = sphi 0, %s37
    %s54 = sphi 0, %s38
    %s58 = sphi 0, %s58
    %s60 = sphi 0, %s58
    %s61 = sphi 0, %s60
    %s75 = sphi 0, %s61
    %s81 = sphi 0, %s83
    %s84 = sphi 0, %s81
    %s85 = sphi 0, %s84
    %s101 = sphi 0, %s85
    %s105 = sphi 0, %s105
    %s107 = sphi 0, %s105
    %s108 = sphi 0, %s107
    %s122 = sphi 0, %s108
    %s128 = sphi 0, %s130
    %s131 = sphi 0, %s128
    %s132 = sphi 0, %s131
    %s148 = sphi 0, %s132
  $region4: #{gcn_forward.1} parent=0 // loop_header_branch
    %13 = sbr.rel (%p11) target = $region8
  $region5: #{gcn_forward.1} parent=0 // loop_body
    %s15 = ssub.s32 %s10, 1
    %s16 = ssub.s32 %s10, 2
    %s23 = sadd.s32 1, %s18
    %p24 = scmp.ge.s32.totalorder %s23, 4
    %s25 = scalar_select %p24, 0, %s23
    %s26 = sadd.s32 1, %s17
    %s27 = scalar_select %p24, %s26, %s17
    %p28 = scmp.ge.s32.totalorder %s27, 1
    %s29 = scalar_select %p28, 0, %s27
    %s30 = ssub.s32 %s18, %s25
    %s31 = ssub.s32 %s17, %s29
    %s32 = sor.u32 %s30, %s31
    %p33 = scmp.eq.s32.totalorder %s32, 0
    %s35 = sadd.s32 %s34, 1
    %s36 = scalar_select %p33, %s34, %s35
    %p39 = pneg %p33
    %p40 = scmp.eq.s32.totalorder %s10, 3
    %p41 = por %p39, %p40
    %p42 = scmp.ne.s32.totalorder %s34, %s37
    %p43 = scmp.eq.s32.totalorder %s10, 0
    %p44 = por %p42, %p43
    %p45 = scmp.ne.s32.totalorder %s34, %s37
    %p46 = scmp.eq.s32.totalorder %s15, 3
    %p47 = por %p45, %p46
    %p48 = scmp.ne.s32.totalorder %s37, %s38
    %p49 = scmp.eq.s32.totalorder %s15, 0
    %p50 = por %p48, %p49
    %p51 = scmp.ne.s32.totalorder %s37, %s38
    %p52 = scmp.eq.s32.totalorder %s16, 3
    %p53 = por %p51, %p52
    %p55 = scmp.ne.s32.totalorder %s38, %s54
    %p56 = scmp.eq.s32.totalorder %s16, 0
    %p57 = por %p55, %p56
    %s59 = sadd.s32 %s58, 1
    %p62 = scmp.eq.s32.totalorder %s10, 3
    %p63 = scmp.ne.s32.totalorder %s58, %s60
    %p64 = scmp.eq.s32.totalorder %s10, 0
    %p65 = por %p63, %p64
    %p66 = scmp.ne.s32.totalorder %s58, %s60
    %p67 = scmp.eq.s32.totalorder %s15, 3
    %p68 = por %p66, %p67
    %p69 = scmp.ne.s32.totalorder %s60, %s61
    %p70 = scmp.eq.s32.totalorder %s15, 0
    %p71 = por %p69, %p70
    %p72 = scmp.ne.s32.totalorder %s60, %s61
    %p73 = scmp.eq.s32.totalorder %s16, 3
    %p74 = por %p72, %p73
    %p76 = scmp.ne.s32.totalorder %s61, %s75
    %p77 = scmp.eq.s32.totalorder %s16, 0
    %p78 = por %p76, %p77
    %s79 = ssub.s32 %s18, %s25
    %p80 = scmp.eq.s32.totalorder %s79, 0
    %s82 = sadd.s32 %s81, 1
    %s83 = scalar_select %p80, %s81, %s82
    %p86 = pneg %p80
    %p87 = scmp.eq.s32.totalorder %s10, 3
    %p88 = por %p86, %p87
    %p89 = scmp.ne.s32.totalorder %s81, %s84
    %p90 = scmp.eq.s32.totalorder %s10, 0
    %p91 = por %p89, %p90
    %p92 = scmp.ne.s32.totalorder %s81, %s84
    %p93 = scmp.eq.s32.totalorder %s15, 3
    %p94 = por %p92, %p93
    %p95 = scmp.ne.s32.totalorder %s84, %s85
    %p96 = scmp.eq.s32.totalorder %s15, 0
    %p97 = por %p95, %p96
    %p98 = scmp.ne.s32.totalorder %s84, %s85
    %p99 = scmp.eq.s32.totalorder %s16, 3
    %p100 = por %p98, %p99
    %p102 = scmp.ne.s32.totalorder %s85, %s101
    %p103 = scmp.eq.s32.totalorder %s16, 0
    %p104 = por %p102, %p103
    %s106 = sadd.s32 %s105, 1
    %p109 = scmp.eq.s32.totalorder %s10, 3
    %p110 = scmp.ne.s32.totalorder %s105, %s107
    %p111 = scmp.eq.s32.totalorder %s10, 0
    %p112 = por %p110, %p111
    %p113 = scmp.ne.s32.totalorder %s105, %s107
    %p114 = scmp.eq.s32.totalorder %s15, 3
    %p115 = por %p113, %p114
    %p116 = scmp.ne.s32.totalorder %s107, %s108
    %p117 = scmp.eq.s32.totalorder %s15, 0
    %p118 = por %p116, %p117
    %p119 = scmp.ne.s32.totalorder %s107, %s108
    %p120 = scmp.eq.s32.totalorder %s16, 3
    %p121 = por %p119, %p120
    %p123 = scmp.ne.s32.totalorder %s108, %s122
    %p124 = scmp.eq.s32.totalorder %s16, 0
    %p125 = por %p123, %p124
    %s126 = ssub.s32 %s17, %s29
    %p127 = scmp.eq.s32.totalorder %s126, 0
    %s129 = sadd.s32 %s128, 1
    %s130 = scalar_select %p127, %s128, %s129
    %p133 = pneg %p127
    %p134 = scmp.eq.s32.totalorder %s10, 3
    %p135 = por %p133, %p134
    %p136 = scmp.ne.s32.totalorder %s128, %s131
    %p137 = scmp.eq.s32.totalorder %s10, 0
    %p138 = por %p136, %p137
    %p139 = scmp.ne.s32.totalorder %s128, %s131
    %p140 = scmp.eq.s32.totalorder %s15, 3
    %p141 = por %p139, %p140
    %p142 = scmp.ne.s32.totalorder %s131, %s132
    %p143 = scmp.eq.s32.totalorder %s15, 0
    %p144 = por %p142, %p143
    %p145 = scmp.ne.s32.totalorder %s131, %s132
    %p146 = scmp.eq.s32.totalorder %s16, 3
    %p147 = por %p145, %p146
    %p149 = scmp.ne.s32.totalorder %s132, %s148
    %p150 = scmp.eq.s32.totalorder %s16, 0
    %p151 = por %p149, %p150
    %p152 = scmp.le.s32.totalorder 1, %s10
    %p153 = scmp.lt.s32.totalorder %s10, 5
    %p154 = pnand %p152, %p153
    %p155 = pneg %p154
    // Predicated region
    $region9: #{gcn_forward.1} parent=5 // pred_check
      _
    $region10: #{gcn_forward.1} parent=5 // pred_check_branch
      %157 = sbr.rel (%p154) target = $region12
    $region11: #{gcn_forward.1} parent=5 // pred_region
      %s158 = ssub.s32 %s10, 1
      // Predicated region
      $region13: #{gcn_forward.1} parent=11 // pred_check
        %p159 = pneg %p71
      $region14: #{gcn_forward.1} parent=11 // pred_check_branch
        %161 = sbr.rel (%p159) target = $region16
      $region15: #{gcn_forward.1} parent=11 // pred_region
        _
      $region16: #{gcn_forward.1} parent=11 // pred_fallthru
        _
      // Predicated region
      $region17: #{gcn_forward.1} parent=11 // pred_check
        %p162 = pneg %p118
      $region18: #{gcn_forward.1} parent=11 // pred_check_branch
        %164 = sbr.rel (%p162) target = $region20
      $region19: #{gcn_forward.1} parent=11 // pred_region
        _
      $region20: #{gcn_forward.1} parent=11 // pred_fallthru
        _
    $region12: #{gcn_forward.1} parent=5 // pred_fallthru
      _
    %p165 = scmp.lt.s32.totalorder %s10, 4
    // Predicated region
    $region21: #{gcn_forward.1} parent=5 // pred_check
      %p166 = pneg %p165
    $region22: #{gcn_forward.1} parent=5 // pred_check_branch
      %168 = sbr.rel (%p166) target = $region24
    $region23: #{gcn_forward.1} parent=5 // pred_region
      // Predicated region
      $region25: #{gcn_forward.1} parent=23 // pred_check
        %p169 = pneg %p44
      $region26: #{gcn_forward.1} parent=23 // pred_check_branch
        %171 = sbr.rel (%p169) target = $region28
      $region27: #{gcn_forward.1} parent=23 // pred_region
        %p172 = scmp.lt.s32.totalorder %s18, 3
        %s173 = scalar_select %p172, %s18, 3
        %p174 = scmp.lt.s32.totalorder %s17, 0
        %s175 = scalar_select %p174, %s17, 0
        %s176 = sadd.s32 %s175, %s173
        %s177 = smul.addr %s176, 8
        %s178 = scalar_lea.vmem %s0, %s177
      $region28: #{gcn_forward.1} parent=23 // pred_fallthru
        _
      // Predicated region
      $region29: #{gcn_forward.1} parent=23 // pred_check
        %p179 = pneg %p91
      $region30: #{gcn_forward.1} parent=23 // pred_check_branch
        %181 = sbr.rel (%p179) target = $region32
      $region31: #{gcn_forward.1} parent=23 // pred_region
        %p182 = scmp.lt.s32.totalorder %s18, 3
        %s183 = scalar_select %p182, %s18, 3
        %s184 = smul.addr %s183, 56
        %s185 = scalar_lea.vmem %s2, %s184
      $region32: #{gcn_forward.1} parent=23 // pred_fallthru
        _
    $region24: #{gcn_forward.1} parent=5 // pred_fallthru
      _
    %p186 = scmp.le.s32.totalorder 1, %s10
    %p187 = scmp.lt.s32.totalorder %s10, 5
    %p188 = pnand %p186, %p187
    %p189 = pneg %p188
    // Predicated region
    $region33: #{gcn_forward.1} parent=5 // pred_check
      _
    $region34: #{gcn_forward.1} parent=5 // pred_check_branch
      %191 = sbr.rel (%p188) target = $region36
    $region35: #{gcn_forward.1} parent=5 // pred_region
      %s192 = ssub.s32 %s10, 1
      %p193 = scmp.lt.s32.totalorder %s20, 3
      %s194 = scalar_select %p193, %s20, 3
      %p195 = scmp.lt.s32.totalorder %s19, 0
      %s196 = scalar_select %p195, %s19, 0
      %s197 = sadd.s32 %s196, %s194
      %s198 = smul.addr %s197, 8
      %s199 = scalar_lea.vmem %s0, %s198
      %p200 = pneg %p50
      %p201 = pneg %p47
      %p202 = pneg %p71
      %p203 = pneg %p68
      %p204 = scmp.lt.s32.totalorder %s20, 3
      %s205 = scalar_select %p204, %s20, 3
      %s206 = smul.addr %s205, 56
      %s207 = scalar_lea.vmem %s2, %s206
      %p208 = pneg %p97
      %p209 = pneg %p94
      %p210 = pneg %p118
      %p211 = pneg %p115
      %p212 = pneg %p144
      %p213 = pneg %p141
      %p214 = scmp.lt.s32.totalorder %s19, 0
      %s215 = scalar_select %p214, %s19, 0
      %s216 = smul.addr %s215, 8
      %s217 = scalar_lea.vmem %s4, %s216
      %p218 = scmp.lt.s32.totalorder %s20, 3
      %s219 = scalar_select %p218, %s20, 3
      %p220 = scmp.lt.s32.totalorder %s19, 0
      %s221 = scalar_select %p220, %s19, 0
      %s222 = sadd.s32 %s221, %s219
      %s223 = smul.addr %s222, 8
      %s224 = scalar_lea.vmem %s0, %s223
      %p225 = scmp.lt.s32.totalorder %s20, 3
      %s226 = scalar_select %p225, %s20, 3
      %s227 = smul.addr %s226, 56
      %s228 = scalar_lea.vmem %s2, %s227
      %p229 = scmp.lt.s32.totalorder %s19, 0
      %s230 = scalar_select %p229, %s19, 0
      %s231 = smul.addr %s230, 8
      %s232 = scalar_lea.vmem %s4, %s231
      %p233 = scmp.eq.s32.totalorder %s20, 0
      // Predicated region
      $region37: #{gcn_forward.1} parent=35 // pred_check
        %p234 = pneg %p233
      $region38: #{gcn_forward.1} parent=35 // pred_check_branch
        %236 = sbr.rel (%p234) target = $region40
      $region39: #{gcn_forward.1} parent=35 // pred_region
        %v237 = vld [vmem:[%s3] sm:$0x1]
        %v238 = vld [vmem:[%s3 + $0x1] sm:$0x1]
        %v239 = vld [vmem:[%s3 + $0x2] sm:$0x1]
        %v240 = vld [vmem:[%s3 + $0x3] sm:$0x1]
        %v241 = vld [vmem:[%s3 + $0x4] sm:$0x1]
        %v242 = vld [vmem:[%s3 + $0x5] sm:$0x1]
        %v243 = vld [vmem:[%s3 + $0x6] sm:$0x1]
        %v244 = vld [vmem:[%s3 + $0x7] sm:$0x1]
        %v253 = vlaneseq
        %v254 = vshrl.u32 %v253, 7
        %v255 = vsub.s32 0, %v254
        %v256 = vrot.slane %v237, %v255
        %v257 = vlaneseq
        %v258 = vshrl.u32 %v257, 7
        %v259 = vsub.s32 0, %v258
        %v260 = vrot.slane %v238, %v259
        %v261 = vlaneseq
        %v262 = vshrl.u32 %v261, 7
        %v263 = vsub.s32 0, %v262
        %v264 = vrot.slane %v239, %v263
        %v265 = vlaneseq
        %v266 = vshrl.u32 %v265, 7
        %v267 = vsub.s32 0, %v266
        %v268 = vrot.slane %v240, %v267
        %v269 = vlaneseq
        %v270 = vshrl.u32 %v269, 7
        %v271 = vsub.s32 0, %v270
        %v272 = vrot.slane %v241, %v271
        %v273 = vlaneseq
        %v274 = vshrl.u32 %v273, 7
        %v275 = vsub.s32 0, %v274
        %v276 = vrot.slane %v242, %v275
        %v277 = vlaneseq
        %v278 = vshrl.u32 %v277, 7
        %v279 = vsub.s32 0, %v278
        %v280 = vrot.slane %v243, %v279
        %v281 = vlaneseq
        %v282 = vshrl.u32 %v281, 7
        %v283 = vsub.s32 0, %v282
        %v284 = vrot.slane %v244, %v283
        %285 = vset.pattern.permute.xlu0 0
        %286 = vperm.xlu0 %285, %v256
        %v287 = vpop.permute.xlu0 %286
        %289 = vset.pattern.permute.xlu0 0
        %290 = vperm.xlu0 %289, %v260
        %v291 = vpop.permute.xlu0 %290
        %293 = vset.pattern.permute.xlu0 0
        %294 = vperm.xlu0 %293, %v264
        %v295 = vpop.permute.xlu0 %294
        %297 = vset.pattern.permute.xlu0 0
        %298 = vperm.xlu0 %297, %v268
        %v299 = vpop.permute.xlu0 %298
        %301 = vset.pattern.permute.xlu0 0
        %302 = vperm.xlu0 %301, %v272
        %v303 = vpop.permute.xlu0 %302
        %305 = vset.pattern.permute.xlu0 0
        %306 = vperm.xlu0 %305, %v276
        %v307 = vpop.permute.xlu0 %306
        %309 = vset.pattern.permute.xlu0 0
        %310 = vperm.xlu0 %309, %v280
        %v311 = vpop.permute.xlu0 %310
        %313 = vset.pattern.permute.xlu0 0
        %314 = vperm.xlu0 %313, %v284
        %v315 = vpop.permute.xlu0 %314
        %vm317 = vcmask 261120
        %318 = vst.msk [vmem:[%s232] sm:$0xff] %vm317, %v287
        %319 = vst.msk [vmem:[%s232 + $0x8] sm:$0xff] %vm317, %v291
        %320 = vst.msk [vmem:[%s232 + $0x10] sm:$0xff] %vm317, %v295
        %321 = vst.msk [vmem:[%s232 + $0x18] sm:$0xff] %vm317, %v299
        %322 = vst.msk [vmem:[%s232 + $0x20] sm:$0xff] %vm317, %v303
        %323 = vst.msk [vmem:[%s232 + $0x28] sm:$0xff] %vm317, %v307
        %324 = vst.msk [vmem:[%s232 + $0x30] sm:$0xff] %vm317, %v311
        %325 = vst.msk [vmem:[%s232 + $0x38] sm:$0xff] %vm317, %v315
      $region40: #{gcn_forward.1} parent=35 // pred_fallthru
        _
      %v326 = vld [vmem:[%s224] sm:$0xff]
      %v327 = vld [vmem:[%s228] sm:$0x1]
      %v328 = vld [vmem:[%s228 + $0x1] sm:$0x1]
      %v329 = vld [vmem:[%s228 + $0x2] sm:$0x1]
      %v330 = vld [vmem:[%s228 + $0x3] sm:$0x1]
      %v331 = vld [vmem:[%s228 + $0x4] sm:$0x1]
      %v332 = vld [vmem:[%s228 + $0x5] sm:$0x1]
      %v333 = vld [vmem:[%s228 + $0x6] sm:$0x1]
      %v334 = vld [vmem:[%s228 + $0x7] sm:$0x1]
      %v343 = vlaneseq
      %v344 = vshrl.u32 %v343, 7
      %v345 = vsub.s32 0, %v344
      %v346 = vrot.slane %v327, %v345
      %v347 = vlaneseq
      %v348 = vshrl.u32 %v347, 7
      %v349 = vsub.s32 0, %v348
      %v350 = vrot.slane %v328, %v349
      %v351 = vlaneseq
      %v352 = vshrl.u32 %v351, 7
      %v353 = vsub.s32 0, %v352
      %v354 = vrot.slane %v329, %v353
      %v355 = vlaneseq
      %v356 = vshrl.u32 %v355, 7
      %v357 = vsub.s32 0, %v356
      %v358 = vrot.slane %v330, %v357
      %v359 = vlaneseq
      %v360 = vshrl.u32 %v359, 7
      %v361 = vsub.s32 0, %v360
      %v362 = vrot.slane %v331, %v361
      %v363 = vlaneseq
      %v364 = vshrl.u32 %v363, 7
      %v365 = vsub.s32 0, %v364
      %v366 = vrot.slane %v332, %v365
      %v367 = vlaneseq
      %v368 = vshrl.u32 %v367, 7
      %v369 = vsub.s32 0, %v368
      %v370 = vrot.slane %v333, %v369
      %v371 = vlaneseq
      %v372 = vshrl.u32 %v371, 7
      %v373 = vsub.s32 0, %v372
      %v374 = vrot.slane %v334, %v373
      %375 = vset.pattern.permute.xlu0 0
      %376 = vperm.xlu0 %375, %v346
      %v377 = vpop.permute.xlu0 %376
      %379 = vset.pattern.permute.xlu0 0
      %380 = vperm.xlu0 %379, %v350
      %v381 = vpop.permute.xlu0 %380
      %383 = vset.pattern.permute.xlu0 0
      %384 = vperm.xlu0 %383, %v354
      %v385 = vpop.permute.xlu0 %384
      %387 = vset.pattern.permute.xlu0 0
      %388 = vperm.xlu0 %387, %v358
      %v389 = vpop.permute.xlu0 %388
      %391 = vset.pattern.permute.xlu0 0
      %392 = vperm.xlu0 %391, %v362
      %v393 = vpop.permute.xlu0 %392
      %395 = vset.pattern.permute.xlu0 0
      %396 = vperm.xlu0 %395, %v366
      %v397 = vpop.permute.xlu0 %396
      %399 = vset.pattern.permute.xlu0 0
      %400 = vperm.xlu0 %399, %v370
      %v401 = vpop.permute.xlu0 %400
      %403 = vset.pattern.permute.xlu0 0
      %404 = vperm.xlu0 %403, %v374
      %v405 = vpop.permute.xlu0 %404
      %v407 = vmul.f32 %v377, %v326
      %v408 = vmul.f32 %v381, %v326
      %v409 = vmul.f32 %v385, %v326
      %v410 = vmul.f32 %v389, %v326
      %v411 = vmul.f32 %v393, %v326
      %v412 = vmul.f32 %v397, %v326
      %v413 = vmul.f32 %v401, %v326
      %v414 = vmul.f32 %v405, %v326
      %v415 = vld [vmem:[%s1] sm:$0xff]
      %v416 = vld [vmem:[%s1 + $0x8] sm:$0xff]
      %v417 = vld [vmem:[%s1 + $0x10] sm:$0xff]
      %vm418 = vcmask 64512
      %v420 = vsel %vm418, %v415, 0
      %v423 = vsel %vm418, %v416, 0
      %v426 = vsel %vm418, %v417, 0
      %428 = vmatprep.subr.mxu0 0.0
      %429 = vmatpush1.msra.mxu0 %v326
      %430 = vmatprep.subr.mxu0 0.0
      %431 = vmatpush1.msra.mxu0 0.0
      %432 = vmatprep.subr.mxu0 0.0
      %433 = vmatpush1.msra.mxu0 0.0
      %434 = vmatprep.subr.mxu0 0.0
      %435 = vmatpush1.msra.mxu0 0.0
      %436 = vmatprep.subr.mxu0 0.0
      %437 = vmatpush1.msra.mxu0 0.0
      %438 = vmatprep.subr.mxu0 0.0
      %439 = vmatpush1.msra.mxu0 0.0
      %440 = vmatprep.subr.mxu0 0.0
      %441 = vmatpush1.msra.mxu0 0.0
      %442 = vmatprep.subr.mxu0 0.0
      %443 = vmatpush1.msra.mxu0 0.0
      %444 = vmatprep.subr.mxu0 0.0
      %445 = vmatpush1.msra.mxu0 0.0
      %446 = vmatprep.subr.mxu0 0.0
      %447 = vmatpush1.msra.mxu0 0.0
      %448 = vmatprep.subr.mxu0 0.0
      %449 = vmatpush1.msra.mxu0 0.0
      %450 = vmatprep.subr.mxu0 0.0
      %451 = vmatpush1.msra.mxu0 0.0
      %452 = vmatprep.subr.mxu0 0.0
      %453 = vmatpush1.msra.mxu0 0.0
      %454 = vmatprep.subr.mxu0 0.0
      %455 = vmatpush1.msra.mxu0 0.0
      %456 = vmatprep.subr.mxu0 0.0
      %457 = vmatpush1.msra.mxu0 0.0
      %458 = vmatprep.subr.mxu0 0.0
      %459 = vmatpush1.msra.mxu0 0.0
      %460 = vmatprep.subr.mxu0 0.0
      %461 = vmatpush1.msra.mxu0 0.0
      %462 = vmatprep.subr.mxu0 0.0
      %463 = vmatpush1.msra.mxu0 0.0
      %464 = vmatprep.subr.mxu0 0.0
      %465 = vmatpush1.msra.mxu0 0.0
      %466 = vmatprep.subr.mxu0 0.0
      %467 = vmatpush1.msra.mxu0 0.0
      %468 = vmatprep.subr.mxu0 0.0
      %469 = vmatpush1.msra.mxu0 0.0
      %470 = vmatprep.subr.mxu0 0.0
      %471 = vmatpush1.msra.mxu0 0.0
      %472 = vmatprep.subr.mxu0 0.0
      %473 = vmatpush1.msra.mxu0 0.0
      %474 = vmatprep.subr.mxu0 0.0
      %475 = vmatpush1.msra.mxu0 0.0
      %476 = vmatprep.subr.mxu0 0.0
      %477 = vmatpush1.msra.mxu0 0.0
      %478 = vmatprep.subr.mxu0 0.0
      %479 = vmatpush1.msra.mxu0 0.0
      %480 = vmatprep.subr.mxu0 0.0
      %481 = vmatpush1.msra.mxu0 0.0
      %482 = vmatprep.subr.mxu0 0.0
      %483 = vmatpush1.msra.mxu0 0.0
      %484 = vmatprep.subr.mxu0 0.0
      %485 = vmatpush1.msra.mxu0 0.0
      %486 = vmatprep.subr.mxu0 0.0
      %487 = vmatpush1.msra.mxu0 0.0
      %488 = vmatprep.subr.mxu0 0.0
      %489 = vmatpush1.msra.mxu0 0.0
      %490 = vmatprep.subr.mxu0 0.0
      %491 = vmatpush1.msra.mxu0 0.0
      %492 = vmatprep.mubr.f32.mxu0 0.0
      %493 = vmatmul.mubr.f32.gmra.mrb[0].mxu0 %v420
      %v494 = vpop.f32.mrb[0].mxu0
      %v495 = vadd.f32 0.0, %v494
      %v496 = vpop.f32.mrb[0].mxu0
      %497 = vmatprep.mubr.f32.mxu0 0.0
      %498 = vmatmul.mubr.f32.gmra.mrb[0].mxu0 %v423
      %v499 = vpop.f32.mrb[0].mxu0
      %v500 = vadd.f32 0.0, %v499
      %v501 = vpop.f32.mrb[0].mxu0
      %502 = vmatprep.mubr.f32.mxu0 0.0
      %503 = vmatmul.mubr.f32.gmra.mrb[0].mxu0 %v426
      %v504 = vpop.f32.mrb[0].mxu0
      %v505 = vadd.f32 0.0, %v504
      %v506 = vpop.f32.mrb[0].mxu0
      %507 = vdwg.mxu0
      %v508 = vld [vmem:[%s1] sm:$0xff]
      %s509 = scalar_lea.vmem %s228, 8
      %v510 = vld [vmem:[%s509] sm:$0x1]
      %v511 = vld [vmem:[%s509 + $0x1] sm:$0x1]
      %v512 = vld [vmem:[%s509 + $0x2] sm:$0x1]
      %v513 = vld [vmem:[%s509 + $0x3] sm:$0x1]
      %v514 = vld [vmem:[%s509 + $0x4] sm:$0x1]
      %v515 = vld [vmem:[%s509 + $0x5] sm:$0x1]
      %v516 = vld [vmem:[%s509 + $0x6] sm:$0x1]
      %v517 = vld [vmem:[%s509 + $0x7] sm:$0x1]
      %v526 = vlaneseq
      %v527 = vshrl.u32 %v526, 7
      %v528 = vsub.s32 0, %v527
      %v529 = vrot.slane %v510, %v528
      %v530 = vlaneseq
      %v531 = vshrl.u32 %v530, 7
      %v532 = vsub.s32 0, %v531
      %v533 = vrot.slane %v511, %v532
      %v534 = vlaneseq
      %v535 = vshrl.u32 %v534, 7
      %v536 = vsub.s32 0, %v535
      %v537 = vrot.slane %v512, %v536
      %v538 = vlaneseq
      %v539 = vshrl.u32 %v538, 7
      %v540 = vsub.s32 0, %v539
      %v541 = vrot.slane %v513, %v540
      %v542 = vlaneseq
      %v543 = vshrl.u32 %v542, 7
      %v544 = vsub.s32 0, %v543
      %v545 = vrot.slane %v514, %v544
      %v546 = vlaneseq
      %v547 = vshrl.u32 %v546, 7
      %v548 = vsub.s32 0, %v547
      %v549 = vrot.slane %v515, %v548
      %v550 = vlaneseq
      %v551 = vshrl.u32 %v550, 7
      %v552 = vsub.s32 0, %v551
      %v553 = vrot.slane %v516, %v552
      %v554 = vlaneseq
      %v555 = vshrl.u32 %v554, 7
      %v556 = vsub.s32 0, %v555
      %v557 = vrot.slane %v517, %v556
      %558 = vset.pattern.permute.xlu0 0
      %559 = vperm.xlu0 %558, %v529
      %v560 = vpop.permute.xlu0 %559
      %562 = vset.pattern.permute.xlu0 0
      %563 = vperm.xlu0 %562, %v533
      %v564 = vpop.permute.xlu0 %563
      %566 = vset.pattern.permute.xlu0 0
      %567 = vperm.xlu0 %566, %v537
      %v568 = vpop.permute.xlu0 %567
      %570 = vset.pattern.permute.xlu0 0
      %571 = vperm.xlu0 %570, %v541
      %v572 = vpop.permute.xlu0 %571
      %574 = vset.pattern.permute.xlu0 0
      %575 = vperm.xlu0 %574, %v545
      %v576 = vpop.permute.xlu0 %575
      %578 = vset.pattern.permute.xlu0 0
      %579 = vperm.xlu0 %578, %v549
      %v580 = vpop.permute.xlu0 %579
      %582 = vset.pattern.permute.xlu0 0
      %583 = vperm.xlu0 %582, %v553
      %v584 = vpop.permute.xlu0 %583
      %586 = vset.pattern.permute.xlu0 0
      %587 = vperm.xlu0 %586, %v557
      %v588 = vpop.permute.xlu0 %587
      %v590 = vmul.f32 %v560, %v495
      %v591 = vmul.f32 %v564, %v495
      %v592 = vmul.f32 %v568, %v495
      %v593 = vmul.f32 %v572, %v495
      %v594 = vmul.f32 %v576, %v495
      %v595 = vmul.f32 %v580, %v495
      %v596 = vmul.f32 %v584, %v495
      %v597 = vmul.f32 %v588, %v495
      %v598 = vadd.f32 %v407, %v590
      %v599 = vadd.f32 %v408, %v591
      %v600 = vadd.f32 %v409, %v592
      %v601 = vadd.f32 %v410, %v593
      %v602 = vadd.f32 %v411, %v594
      %v603 = vadd.f32 %v412, %v595
      %v604 = vadd.f32 %v413, %v596
      %v605 = vadd.f32 %v414, %v597
      %v607 = vsel %vm418, %v508, 0
      %609 = vmatprep.subr.mxu0 0.0
      %610 = vmatpush1.msra.mxu0 %v495
      %611 = vmatprep.subr.mxu0 0.0
      %612 = vmatpush1.msra.mxu0 0.0
      %613 = vmatprep.subr.mxu0 0.0
      %614 = vmatpush1.msra.mxu0 0.0
      %615 = vmatprep.subr.mxu0 0.0
      %616 = vmatpush1.msra.mxu0 0.0
      %617 = vmatprep.subr.mxu0 0.0
      %618 = vmatpush1.msra.mxu0 0.0
      %619 = vmatprep.subr.mxu0 0.0
      %620 = vmatpush1.msra.mxu0 0.0
      %621 = vmatprep.subr.mxu0 0.0
      %622 = vmatpush1.msra.mxu0 0.0
      %623 = vmatprep.subr.mxu0 0.0
      %624 = vmatpush1.msra.mxu0 0.0
      %625 = vmatprep.subr.mxu0 0.0
      %626 = vmatpush1.msra.mxu0 0.0
      %627 = vmatprep.subr.mxu0 0.0
      %628 = vmatpush1.msra.mxu0 0.0
      %629 = vmatprep.subr.mxu0 0.0
      %630 = vmatpush1.msra.mxu0 0.0
      %631 = vmatprep.subr.mxu0 0.0
      %632 = vmatpush1.msra.mxu0 0.0
      %633 = vmatprep.subr.mxu0 0.0
      %634 = vmatpush1.msra.mxu0 0.0
      %635 = vmatprep.subr.mxu0 0.0
      %636 = vmatpush1.msra.mxu0 0.0
      %637 = vmatprep.subr.mxu0 0.0
      %638 = vmatpush1.msra.mxu0 0.0
      %639 = vmatprep.subr.mxu0 0.0
      %640 = vmatpush1.msra.mxu0 0.0
      %641 = vmatprep.subr.mxu0 0.0
      %642 = vmatpush1.msra.mxu0 0.0
      %643 = vmatprep.subr.mxu0 0.0
      %644 = vmatpush1.msra.mxu0 0.0
      %645 = vmatprep.subr.mxu0 0.0
      %646 = vmatpush1.msra.mxu0 0.0
      %647 = vmatprep.subr.mxu0 0.0
      %648 = vmatpush1.msra.mxu0 0.0
      %649 = vmatprep.subr.mxu0 0.0
      %650 = vmatpush1.msra.mxu0 0.0
      %651 = vmatprep.subr.mxu0 0.0
      %652 = vmatpush1.msra.mxu0 0.0
      %653 = vmatprep.subr.mxu0 0.0
      %654 = vmatpush1.msra.mxu0 0.0
      %655 = vmatprep.subr.mxu0 0.0
      %656 = vmatpush1.msra.mxu0 0.0
      %657 = vmatprep.subr.mxu0 0.0
      %658 = vmatpush1.msra.mxu0 0.0
      %659 = vmatprep.subr.mxu0 0.0
      %660 = vmatpush1.msra.mxu0 0.0
      %661 = vmatprep.subr.mxu0 0.0
      %662 = vmatpush1.msra.mxu0 0.0
      %663 = vmatprep.subr.mxu0 0.0
      %664 = vmatpush1.msra.mxu0 0.0
      %665 = vmatprep.subr.mxu0 0.0
      %666 = vmatpush1.msra.mxu0 0.0
      %667 = vmatprep.subr.mxu0 0.0
      %668 = vmatpush1.msra.mxu0 0.0
      %669 = vmatprep.subr.mxu0 0.0
      %670 = vmatpush1.msra.mxu0 0.0
      %671 = vmatprep.subr.mxu0 0.0
      %672 = vmatpush1.msra.mxu0 0.0
      %673 = vmatprep.mubr.f32.mxu0 0.0
      %674 = vmatmul.mubr.f32.gmra.mrb[0].mxu0 %v607
      %v675 = vpop.f32.mrb[0].mxu0
      %v676 = vadd.f32 0.0, %v675
      %v677 = vpop.f32.mrb[0].mxu0
      %678 = vdwg.mxu0
      %s679 = scalar_lea.vmem %s228, 16
      %v680 = vld [vmem:[%s679] sm:$0x1]
      %v681 = vld [vmem:[%s679 + $0x1] sm:$0x1]
      %v682 = vld [vmem:[%s679 + $0x2] sm:$0x1]
      %v683 = vld [vmem:[%s679 + $0x3] sm:$0x1]
      %v684 = vld [vmem:[%s679 + $0x4] sm:$0x1]
      %v685 = vld [vmem:[%s679 + $0x5] sm:$0x1]
      %v686 = vld [vmem:[%s679 + $0x6] sm:$0x1]
      %v687 = vld [vmem:[%s679 + $0x7] sm:$0x1]
      %v696 = vlaneseq
      %v697 = vshrl.u32 %v696, 7
      %v698 = vsub.s32 0, %v697
      %v699 = vrot.slane %v680, %v698
      %v700 = vlaneseq
      %v701 = vshrl.u32 %v700, 7
      %v702 = vsub.s32 0, %v701
      %v703 = vrot.slane %v681, %v702
      %v704 = vlaneseq
      %v705 = vshrl.u32 %v704, 7
      %v706 = vsub.s32 0, %v705
      %v707 = vrot.slane %v682, %v706
      %v708 = vlaneseq
      %v709 = vshrl.u32 %v708, 7
      %v710 = vsub.s32 0, %v709
      %v711 = vrot.slane %v683, %v710
      %v712 = vlaneseq
      %v713 = vshrl.u32 %v712, 7
      %v714 = vsub.s32 0, %v713
      %v715 = vrot.slane %v684, %v714
      %v716 = vlaneseq
      %v717 = vshrl.u32 %v716, 7
      %v718 = vsub.s32 0, %v717
      %v719 = vrot.slane %v685, %v718
      %v720 = vlaneseq
      %v721 = vshrl.u32 %v720, 7
      %v722 = vsub.s32 0, %v721
      %v723 = vrot.slane %v686, %v722
      %v724 = vlaneseq
      %v725 = vshrl.u32 %v724, 7
      %v726 = vsub.s32 0, %v725
      %v727 = vrot.slane %v687, %v726
      %728 = vset.pattern.permute.xlu0 0
      %729 = vperm.xlu0 %728, %v699
      %v730 = vpop.permute.xlu0 %729
      %732 = vset.pattern.permute.xlu0 0
      %733 = vperm.xlu0 %732, %v703
      %v734 = vpop.permute.xlu0 %733
      %736 = vset.pattern.permute.xlu0 0
      %737 = vperm.xlu0 %736, %v707
      %v738 = vpop.permute.xlu0 %737
      %740 = vset.pattern.permute.xlu0 0
      %741 = vperm.xlu0 %740, %v711
      %v742 = vpop.permute.xlu0 %741
      %744 = vset.pattern.permute.xlu0 0
      %745 = vperm.xlu0 %744, %v715
      %v746 = vpop.permute.xlu0 %745
      %748 = vset.pattern.permute.xlu0 0
      %749 = vperm.xlu0 %748, %v719
      %v750 = vpop.permute.xlu0 %749
      %752 = vset.pattern.permute.xlu0 0
      %753 = vperm.xlu0 %752, %v723
      %v754 = vpop.permute.xlu0 %753
      %756 = vset.pattern.permute.xlu0 0
      %757 = vperm.xlu0 %756, %v727
      %v758 = vpop.permute.xlu0 %757
      %v760 = vmul.f32 %v730, %v676
      %v761 = vmul.f32 %v734, %v676
      %v762 = vmul.f32 %v738, %v676
      %v763 = vmul.f32 %v742, %v676
      %v764 = vmul.f32 %v746, %v676
      %v765 = vmul.f32 %v750, %v676
      %v766 = vmul.f32 %v754, %v676
      %v767 = vmul.f32 %v758, %v676
      %v768 = vadd.f32 %v598, %v760
      %v769 = vadd.f32 %v599, %v761
      %v770 = vadd.f32 %v600, %v762
      %v771 = vadd.f32 %v601, %v763
      %v772 = vadd.f32 %v602, %v764
      %v773 = vadd.f32 %v603, %v765
      %v774 = vadd.f32 %v604, %v766
      %v775 = vadd.f32 %v605, %v767
      %v776 = vld [vmem:[%s1 + $0x8] sm:$0xff]
      %s777 = scalar_lea.vmem %s228, 24
      %v778 = vld [vmem:[%s777] sm:$0x1]
      %v779 = vld [vmem:[%s777 + $0x1] sm:$0x1]
      %v780 = vld [vmem:[%s777 + $0x2] sm:$0x1]
      %v781 = vld [vmem:[%s777 + $0x3] sm:$0x1]
      %v782 = vld [vmem:[%s777 + $0x4] sm:$0x1]
      %v783 = vld [vmem:[%s777 + $0x5] sm:$0x1]
      %v784 = vld [vmem:[%s777 + $0x6] sm:$0x1]
      %v785 = vld [vmem:[%s777 + $0x7] sm:$0x1]
      %v794 = vlaneseq
      %v795 = vshrl.u32 %v794, 7
      %v796 = vsub.s32 0, %v795
      %v797 = vrot.slane %v778, %v796
      %v798 = vlaneseq
      %v799 = vshrl.u32 %v798, 7
      %v800 = vsub.s32 0, %v799
      %v801 = vrot.slane %v779, %v800
      %v802 = vlaneseq
      %v803 = vshrl.u32 %v802, 7
      %v804 = vsub.s32 0, %v803
      %v805 = vrot.slane %v780, %v804
      %v806 = vlaneseq
      %v807 = vshrl.u32 %v806, 7
      %v808 = vsub.s32 0, %v807
      %v809 = vrot.slane %v781, %v808
      %v810 = vlaneseq
      %v811 = vshrl.u32 %v810, 7
      %v812 = vsub.s32 0, %v811
      %v813 = vrot.slane %v782, %v812
      %v814 = vlaneseq
      %v815 = vshrl.u32 %v814, 7
      %v816 = vsub.s32 0, %v815
      %v817 = vrot.slane %v783, %v816
      %v818 = vlaneseq
      %v819 = vshrl.u32 %v818, 7
      %v820 = vsub.s32 0, %v819
      %v821 = vrot.slane %v784, %v820
      %v822 = vlaneseq
      %v823 = vshrl.u32 %v822, 7
      %v824 = vsub.s32 0, %v823
      %v825 = vrot.slane %v785, %v824
      %826 = vset.pattern.permute.xlu0 0
      %827 = vperm.xlu0 %826, %v797
      %v828 = vpop.permute.xlu0 %827
      %830 = vset.pattern.permute.xlu0 0
      %831 = vperm.xlu0 %830, %v801
      %v832 = vpop.permute.xlu0 %831
      %834 = vset.pattern.permute.xlu0 0
      %835 = vperm.xlu0 %834, %v805
      %v836 = vpop.permute.xlu0 %835
      %838 = vset.pattern.permute.xlu0 0
      %839 = vperm.xlu0 %838, %v809
      %v840 = vpop.permute.xlu0 %839
      %842 = vset.pattern.permute.xlu0 0
      %843 = vperm.xlu0 %842, %v813
      %v844 = vpop.permute.xlu0 %843
      %846 = vset.pattern.permute.xlu0 0
      %847 = vperm.xlu0 %846, %v817
      %v848 = vpop.permute.xlu0 %847
      %850 = vset.pattern.permute.xlu0 0
      %851 = vperm.xlu0 %850, %v821
      %v852 = vpop.permute.xlu0 %851
      %854 = vset.pattern.permute.xlu0 0
      %855 = vperm.xlu0 %854, %v825
      %v856 = vpop.permute.xlu0 %855
      %v858 = vmul.f32 %v828, %v500
      %v859 = vmul.f32 %v832, %v500
      %v860 = vmul.f32 %v836, %v500
      %v861 = vmul.f32 %v840, %v500
      %v862 = vmul.f32 %v844, %v500
      %v863 = vmul.f32 %v848, %v500
      %v864 = vmul.f32 %v852, %v500
      %v865 = vmul.f32 %v856, %v500
      %v866 = vadd.f32 %v768, %v858
      %v867 = vadd.f32 %v769, %v859
      %v868 = vadd.f32 %v770, %v860
      %v869 = vadd.f32 %v771, %v861
      %v870 = vadd.f32 %v772, %v862
      %v871 = vadd.f32 %v773, %v863
      %v872 = vadd.f32 %v774, %v864
      %v873 = vadd.f32 %v775, %v865
      %v875 = vsel %vm418, %v776, 0
      %877 = vmatprep.subr.mxu0 0.0
      %878 = vmatpush1.msra.mxu0 %v500
      %879 = vmatprep.subr.mxu0 0.0
      %880 = vmatpush1.msra.mxu0 0.0
      %881 = vmatprep.subr.mxu0 0.0
      %882 = vmatpush1.msra.mxu0 0.0
      %883 = vmatprep.subr.mxu0 0.0
      %884 = vmatpush1.msra.mxu0 0.0
      %885 = vmatprep.subr.mxu0 0.0
      %886 = vmatpush1.msra.mxu0 0.0
      %887 = vmatprep.subr.mxu0 0.0
      %888 = vmatpush1.msra.mxu0 0.0
      %889 = vmatprep.subr.mxu0 0.0
      %890 = vmatpush1.msra.mxu0 0.0
      %891 = vmatprep.subr.mxu0 0.0
      %892 = vmatpush1.msra.mxu0 0.0
      %893 = vmatprep.subr.mxu0 0.0
      %894 = vmatpush1.msra.mxu0 0.0
      %895 = vmatprep.subr.mxu0 0.0
      %896 = vmatpush1.msra.mxu0 0.0
      %897 = vmatprep.subr.mxu0 0.0
      %898 = vmatpush1.msra.mxu0 0.0
      %899 = vmatprep.subr.mxu0 0.0
      %900 = vmatpush1.msra.mxu0 0.0
      %901 = vmatprep.subr.mxu0 0.0
      %902 = vmatpush1.msra.mxu0 0.0
      %903 = vmatprep.subr.mxu0 0.0
      %904 = vmatpush1.msra.mxu0 0.0
      %905 = vmatprep.subr.mxu0 0.0
      %906 = vmatpush1.msra.mxu0 0.0
      %907 = vmatprep.subr.mxu0 0.0
      %908 = vmatpush1.msra.mxu0 0.0
      %909 = vmatprep.subr.mxu0 0.0
      %910 = vmatpush1.msra.mxu0 0.0
      %911 = vmatprep.subr.mxu0 0.0
      %912 = vmatpush1.msra.mxu0 0.0
      %913 = vmatprep.subr.mxu0 0.0
      %914 = vmatpush1.msra.mxu0 0.0
      %915 = vmatprep.subr.mxu0 0.0
      %916 = vmatpush1.msra.mxu0 0.0
      %917 = vmatprep.subr.mxu0 0.0
      %918 = vmatpush1.msra.mxu0 0.0
      %919 = vmatprep.subr.mxu0 0.0
      %920 = vmatpush1.msra.mxu0 0.0
      %921 = vmatprep.subr.mxu0 0.0
      %922 = vmatpush1.msra.mxu0 0.0
      %923 = vmatprep.subr.mxu0 0.0
      %924 = vmatpush1.msra.mxu0 0.0
      %925 = vmatprep.subr.mxu0 0.0
      %926 = vmatpush1.msra.mxu0 0.0
      %927 = vmatprep.subr.mxu0 0.0
      %928 = vmatpush1.msra.mxu0 0.0
      %929 = vmatprep.subr.mxu0 0.0
      %930 = vmatpush1.msra.mxu0 0.0
      %931 = vmatprep.subr.mxu0 0.0
      %932 = vmatpush1.msra.mxu0 0.0
      %933 = vmatprep.subr.mxu0 0.0
      %934 = vmatpush1.msra.mxu0 0.0
      %935 = vmatprep.subr.mxu0 0.0
      %936 = vmatpush1.msra.mxu0 0.0
      %937 = vmatprep.subr.mxu0 0.0
      %938 = vmatpush1.msra.mxu0 0.0
      %939 = vmatprep.subr.mxu0 0.0
      %940 = vmatpush1.msra.mxu0 0.0
      %941 = vmatprep.mubr.f32.mxu0 0.0
      %942 = vmatmul.mubr.f32.gmra.mrb[0].mxu0 %v875
      %v943 = vpop.f32.mrb[0].mxu0
      %v944 = vadd.f32 0.0, %v943
      %v945 = vpop.f32.mrb[0].mxu0
      %946 = vdwg.mxu0
      %s947 = scalar_lea.vmem %s228, 32
      %v948 = vld [vmem:[%s947] sm:$0x1]
      %v949 = vld [vmem:[%s947 + $0x1] sm:$0x1]
      %v950 = vld [vmem:[%s947 + $0x2] sm:$0x1]
      %v951 = vld [vmem:[%s947 + $0x3] sm:$0x1]
      %v952 = vld [vmem:[%s947 + $0x4] sm:$0x1]
      %v953 = vld [vmem:[%s947 + $0x5] sm:$0x1]
      %v954 = vld [vmem:[%s947 + $0x6] sm:$0x1]
      %v955 = vld [vmem:[%s947 + $0x7] sm:$0x1]
      %v964 = vlaneseq
      %v965 = vshrl.u32 %v964, 7
      %v966 = vsub.s32 0, %v965
      %v967 = vrot.slane %v948, %v966
      %v968 = vlaneseq
      %v969 = vshrl.u32 %v968, 7
      %v970 = vsub.s32 0, %v969
      %v971 = vrot.slane %v949, %v970
      %v972 = vlaneseq
      %v973 = vshrl.u32 %v972, 7
      %v974 = vsub.s32 0, %v973
      %v975 = vrot.slane %v950, %v974
      %v976 = vlaneseq
      %v977 = vshrl.u32 %v976, 7
      %v978 = vsub.s32 0, %v977
      %v979 = vrot.slane %v951, %v978
      %v980 = vlaneseq
      %v981 = vshrl.u32 %v980, 7
      %v982 = vsub.s32 0, %v981
      %v983 = vrot.slane %v952, %v982
      %v984 = vlaneseq
      %v985 = vshrl.u32 %v984, 7
      %v986 = vsub.s32 0, %v985
      %v987 = vrot.slane %v953, %v986
      %v988 = vlaneseq
      %v989 = vshrl.u32 %v988, 7
      %v990 = vsub.s32 0, %v989
      %v991 = vrot.slane %v954, %v990
      %v992 = vlaneseq
      %v993 = vshrl.u32 %v992, 7
      %v994 = vsub.s32 0, %v993
      %v995 = vrot.slane %v955, %v994
      %996 = vset.pattern.permute.xlu0 0
      %997 = vperm.xlu0 %996, %v967
      %v998 = vpop.permute.xlu0 %997
      %1000 = vset.pattern.permute.xlu0 0
      %1001 = vperm.xlu0 %1000, %v971
      %v1002 = vpop.permute.xlu0 %1001
      %1004 = vset.pattern.permute.xlu0 0
      %1005 = vperm.xlu0 %1004, %v975
      %v1006 = vpop.permute.xlu0 %1005
      %1008 = vset.pattern.permute.xlu0 0
      %1009 = vperm.xlu0 %1008, %v979
      %v1010 = vpop.permute.xlu0 %1009
      %1012 = vset.pattern.permute.xlu0 0
      %1013 = vperm.xlu0 %1012, %v983
      %v1014 = vpop.permute.xlu0 %1013
      %1016 = vset.pattern.permute.xlu0 0
      %1017 = vperm.xlu0 %1016, %v987
      %v1018 = vpop.permute.xlu0 %1017
      %1020 = vset.pattern.permute.xlu0 0
      %1021 = vperm.xlu0 %1020, %v991
      %v1022 = vpop.permute.xlu0 %1021
      %1024 = vset.pattern.permute.xlu0 0
      %1025 = vperm.xlu0 %1024, %v995
      %v1026 = vpop.permute.xlu0 %1025
      %v1028 = vmul.f32 %v998, %v944
      %v1029 = vmul.f32 %v1002, %v944
      %v1030 = vmul.f32 %v1006, %v944
      %v1031 = vmul.f32 %v1010, %v944
      %v1032 = vmul.f32 %v1014, %v944
      %v1033 = vmul.f32 %v1018, %v944
      %v1034 = vmul.f32 %v1022, %v944
      %v1035 = vmul.f32 %v1026, %v944
      %v1036 = vadd.f32 %v866, %v1028
      %v1037 = vadd.f32 %v867, %v1029
      %v1038 = vadd.f32 %v868, %v1030
      %v1039 = vadd.f32 %v869, %v1031
      %v1040 = vadd.f32 %v870, %v1032
      %v1041 = vadd.f32 %v871, %v1033
      %v1042 = vadd.f32 %v872, %v1034
      %v1043 = vadd.f32 %v873, %v1035
      %s1044 = scalar_lea.vmem %s228, 40
      %v1045 = vld [vmem:[%s1044] sm:$0x1]
      %v1046 = vld [vmem:[%s1044 + $0x1] sm:$0x1]
      %v1047 = vld [vmem:[%s1044 + $0x2] sm:$0x1]
      %v1048 = vld [vmem:[%s1044 + $0x3] sm:$0x1]
      %v1049 = vld [vmem:[%s1044 + $0x4] sm:$0x1]
      %v1050 = vld [vmem:[%s1044 + $0x5] sm:$0x1]
      %v1051 = vld [vmem:[%s1044 + $0x6] sm:$0x1]
      %v1052 = vld [vmem:[%s1044 + $0x7] sm:$0x1]
      %v1061 = vlaneseq
      %v1062 = vshrl.u32 %v1061, 7
      %v1063 = vsub.s32 0, %v1062
      %v1064 = vrot.slane %v1045, %v1063
      %v1065 = vlaneseq
      %v1066 = vshrl.u32 %v1065, 7
      %v1067 = vsub.s32 0, %v1066
      %v1068 = vrot.slane %v1046, %v1067
      %v1069 = vlaneseq
      %v1070 = vshrl.u32 %v1069, 7
      %v1071 = vsub.s32 0, %v1070
      %v1072 = vrot.slane %v1047, %v1071
      %v1073 = vlaneseq
      %v1074 = vshrl.u32 %v1073, 7
      %v1075 = vsub.s32 0, %v1074
      %v1076 = vrot.slane %v1048, %v1075
      %v1077 = vlaneseq
      %v1078 = vshrl.u32 %v1077, 7
      %v1079 = vsub.s32 0, %v1078
      %v1080 = vrot.slane %v1049, %v1079
      %v1081 = vlaneseq
      %v1082 = vshrl.u32 %v1081, 7
      %v1083 = vsub.s32 0, %v1082
      %v1084 = vrot.slane %v1050, %v1083
      %v1085 = vlaneseq
      %v1086 = vshrl.u32 %v1085, 7
      %v1087 = vsub.s32 0, %v1086
      %v1088 = vrot.slane %v1051, %v1087
      %v1089 = vlaneseq
      %v1090 = vshrl.u32 %v1089, 7
      %v1091 = vsub.s32 0, %v1090
      %v1092 = vrot.slane %v1052, %v1091
      %1093 = vset.pattern.permute.xlu0 0
      %1094 = vperm.xlu0 %1093, %v1064
      %v1095 = vpop.permute.xlu0 %1094
      %1097 = vset.pattern.permute.xlu0 0
      %1098 = vperm.xlu0 %1097, %v1068
      %v1099 = vpop.permute.xlu0 %1098
      %1101 = vset.pattern.permute.xlu0 0
      %1102 = vperm.xlu0 %1101, %v1072
      %v1103 = vpop.permute.xlu0 %1102
      %1105 = vset.pattern.permute.xlu0 0
      %1106 = vperm.xlu0 %1105, %v1076
      %v1107 = vpop.permute.xlu0 %1106
      %1109 = vset.pattern.permute.xlu0 0
      %1110 = vperm.xlu0 %1109, %v1080
      %v1111 = vpop.permute.xlu0 %1110
      %1113 = vset.pattern.permute.xlu0 0
      %1114 = vperm.xlu0 %1113, %v1084
      %v1115 = vpop.permute.xlu0 %1114
      %1117 = vset.pattern.permute.xlu0 0
      %1118 = vperm.xlu0 %1117, %v1088
      %v1119 = vpop.permute.xlu0 %1118
      %1121 = vset.pattern.permute.xlu0 0
      %1122 = vperm.xlu0 %1121, %v1092
      %v1123 = vpop.permute.xlu0 %1122
      %v1125 = vmul.f32 %v1095, %v505
      %v1126 = vmul.f32 %v1099, %v505
      %v1127 = vmul.f32 %v1103, %v505
      %v1128 = vmul.f32 %v1107, %v505
      %v1129 = vmul.f32 %v1111, %v505
      %v1130 = vmul.f32 %v1115, %v505
      %v1131 = vmul.f32 %v1119, %v505
      %v1132 = vmul.f32 %v1123, %v505
      %v1133 = vadd.f32 %v1036, %v1125
      %v1134 = vadd.f32 %v1037, %v1126
      %v1135 = vadd.f32 %v1038, %v1127
      %v1136 = vadd.f32 %v1039, %v1128
      %v1137 = vadd.f32 %v1040, %v1129
      %v1138 = vadd.f32 %v1041, %v1130
      %v1139 = vadd.f32 %v1042, %v1131
      %v1140 = vadd.f32 %v1043, %v1132
      %1141 = vmatprep.subr.mxu0 0.0
      %1142 = vmatpush1.msra.mxu0 %v505
      %1143 = vmatprep.subr.mxu0 0.0
      %1144 = vmatpush1.msra.mxu0 0.0
      %1145 = vmatprep.subr.mxu0 0.0
      %1146 = vmatpush1.msra.mxu0 0.0
      %1147 = vmatprep.subr.mxu0 0.0
      %1148 = vmatpush1.msra.mxu0 0.0
      %1149 = vmatprep.subr.mxu0 0.0
      %1150 = vmatpush1.msra.mxu0 0.0
      %1151 = vmatprep.subr.mxu0 0.0
      %1152 = vmatpush1.msra.mxu0 0.0
      %1153 = vmatprep.subr.mxu0 0.0
      %1154 = vmatpush1.msra.mxu0 0.0
      %1155 = vmatprep.subr.mxu0 0.0
      %1156 = vmatpush1.msra.mxu0 0.0
      %1157 = vmatprep.subr.mxu0 0.0
      %1158 = vmatpush1.msra.mxu0 0.0
      %1159 = vmatprep.subr.mxu0 0.0
      %1160 = vmatpush1.msra.mxu0 0.0
      %1161 = vmatprep.subr.mxu0 0.0
      %1162 = vmatpush1.msra.mxu0 0.0
      %1163 = vmatprep.subr.mxu0 0.0
      %1164 = vmatpush1.msra.mxu0 0.0
      %1165 = vmatprep.subr.mxu0 0.0
      %1166 = vmatpush1.msra.mxu0 0.0
      %1167 = vmatprep.subr.mxu0 0.0
      %1168 = vmatpush1.msra.mxu0 0.0
      %1169 = vmatprep.subr.mxu0 0.0
      %1170 = vmatpush1.msra.mxu0 0.0
      %1171 = vmatprep.subr.mxu0 0.0
      %1172 = vmatpush1.msra.mxu0 0.0
      %1173 = vmatprep.subr.mxu0 0.0
      %1174 = vmatpush1.msra.mxu0 0.0
      %1175 = vmatprep.subr.mxu0 0.0
      %1176 = vmatpush1.msra.mxu0 0.0
      %1177 = vmatprep.subr.mxu0 0.0
      %1178 = vmatpush1.msra.mxu0 0.0
      %1179 = vmatprep.subr.mxu0 0.0
      %1180 = vmatpush1.msra.mxu0 0.0
      %1181 = vmatprep.subr.mxu0 0.0
      %1182 = vmatpush1.msra.mxu0 0.0
      %1183 = vmatprep.subr.mxu0 0.0
      %1184 = vmatpush1.msra.mxu0 0.0
      %1185 = vmatprep.subr.mxu0 0.0
      %1186 = vmatpush1.msra.mxu0 0.0
      %1187 = vmatprep.subr.mxu0 0.0
      %1188 = vmatpush1.msra.mxu0 0.0
      %1189 = vmatprep.subr.mxu0 0.0
      %1190 = vmatpush1.msra.mxu0 0.0
      %1191 = vmatprep.subr.mxu0 0.0
      %1192 = vmatpush1.msra.mxu0 0.0
      %1193 = vmatprep.subr.mxu0 0.0
      %1194 = vmatpush1.msra.mxu0 0.0
      %1195 = vmatprep.subr.mxu0 0.0
      %1196 = vmatpush1.msra.mxu0 0.0
      %1197 = vmatprep.subr.mxu0 0.0
      %1198 = vmatpush1.msra.mxu0 0.0
      %1199 = vmatprep.subr.mxu0 0.0
      %1200 = vmatpush1.msra.mxu0 0.0
      %1201 = vmatprep.subr.mxu0 0.0
      %1202 = vmatpush1.msra.mxu0 0.0
      %1203 = vmatprep.subr.mxu0 0.0
      %1204 = vmatpush1.msra.mxu0 0.0
      %1205 = vmatprep.mubr.f32.mxu0 0.0
      %1206 = vmatmul.mubr.f32.gmra.mrb[0].mxu0 %v426
      %v1207 = vpop.f32.mrb[0].mxu0
      %v1208 = vadd.f32 0.0, %v1207
      %v1209 = vpop.f32.mrb[0].mxu0
      %1210 = vdwg.mxu0
      %s1211 = scalar_lea.vmem %s228, 48
      %v1212 = vld [vmem:[%s1211] sm:$0x1]
      %v1213 = vld [vmem:[%s1211 + $0x1] sm:$0x1]
      %v1214 = vld [vmem:[%s1211 + $0x2] sm:$0x1]
      %v1215 = vld [vmem:[%s1211 + $0x3] sm:$0x1]
      %v1216 = vld [vmem:[%s1211 + $0x4] sm:$0x1]
      %v1217 = vld [vmem:[%s1211 + $0x5] sm:$0x1]
      %v1218 = vld [vmem:[%s1211 + $0x6] sm:$0x1]
      %v1219 = vld [vmem:[%s1211 + $0x7] sm:$0x1]
      %v1228 = vlaneseq
      %v1229 = vshrl.u32 %v1228, 7
      %v1230 = vsub.s32 0, %v1229
      %v1231 = vrot.slane %v1212, %v1230
      %v1232 = vlaneseq
      %v1233 = vshrl.u32 %v1232, 7
      %v1234 = vsub.s32 0, %v1233
      %v1235 = vrot.slane %v1213, %v1234
      %v1236 = vlaneseq
      %v1237 = vshrl.u32 %v1236, 7
      %v1238 = vsub.s32 0, %v1237
      %v1239 = vrot.slane %v1214, %v1238
      %v1240 = vlaneseq
      %v1241 = vshrl.u32 %v1240, 7
      %v1242 = vsub.s32 0, %v1241
      %v1243 = vrot.slane %v1215, %v1242
      %v1244 = vlaneseq
      %v1245 = vshrl.u32 %v1244, 7
      %v1246 = vsub.s32 0, %v1245
      %v1247 = vrot.slane %v1216, %v1246
      %v1248 = vlaneseq
      %v1249 = vshrl.u32 %v1248, 7
      %v1250 = vsub.s32 0, %v1249
      %v1251 = vrot.slane %v1217, %v1250
      %v1252 = vlaneseq
      %v1253 = vshrl.u32 %v1252, 7
      %v1254 = vsub.s32 0, %v1253
      %v1255 = vrot.slane %v1218, %v1254
      %v1256 = vlaneseq
      %v1257 = vshrl.u32 %v1256, 7
      %v1258 = vsub.s32 0, %v1257
      %v1259 = vrot.slane %v1219, %v1258
      %1260 = vset.pattern.permute.xlu0 0
      %1261 = vperm.xlu0 %1260, %v1231
      %v1262 = vpop.permute.xlu0 %1261
      %1264 = vset.pattern.permute.xlu0 0
      %1265 = vperm.xlu0 %1264, %v1235
      %v1266 = vpop.permute.xlu0 %1265
      %1268 = vset.pattern.permute.xlu0 0
      %1269 = vperm.xlu0 %1268, %v1239
      %v1270 = vpop.permute.xlu0 %1269
      %1272 = vset.pattern.permute.xlu0 0
      %1273 = vperm.xlu0 %1272, %v1243
      %v1274 = vpop.permute.xlu0 %1273
      %1276 = vset.pattern.permute.xlu0 0
      %1277 = vperm.xlu0 %1276, %v1247
      %v1278 = vpop.permute.xlu0 %1277
      %1280 = vset.pattern.permute.xlu0 0
      %1281 = vperm.xlu0 %1280, %v1251
      %v1282 = vpop.permute.xlu0 %1281
      %1284 = vset.pattern.permute.xlu0 0
      %1285 = vperm.xlu0 %1284, %v1255
      %v1286 = vpop.permute.xlu0 %1285
      %1288 = vset.pattern.permute.xlu0 0
      %1289 = vperm.xlu0 %1288, %v1259
      %v1290 = vpop.permute.xlu0 %1289
      %v1292 = vmul.f32 %v1262, %v1208
      %v1293 = vmul.f32 %v1266, %v1208
      %v1294 = vmul.f32 %v1270, %v1208
      %v1295 = vmul.f32 %v1274, %v1208
      %v1296 = vmul.f32 %v1278, %v1208
      %v1297 = vmul.f32 %v1282, %v1208
      %v1298 = vmul.f32 %v1286, %v1208
      %v1299 = vmul.f32 %v1290, %v1208
      %v1300 = vadd.f32 %v1133, %v1292
      %v1301 = vadd.f32 %v1134, %v1293
      %v1302 = vadd.f32 %v1135, %v1294
      %v1303 = vadd.f32 %v1136, %v1295
      %v1304 = vadd.f32 %v1137, %v1296
      %v1305 = vadd.f32 %v1138, %v1297
      %v1306 = vadd.f32 %v1139, %v1298
      %v1307 = vadd.f32 %v1140, %v1299
      %v1308 = vld [vmem:[%s232] sm:$0xff]
      %v1309 = vld [vmem:[%s232 + $0x8] sm:$0xff]
      %v1310 = vld [vmem:[%s232 + $0x10] sm:$0xff]
      %v1311 = vld [vmem:[%s232 + $0x18] sm:$0xff]
      %v1312 = vld [vmem:[%s232 + $0x20] sm:$0xff]
      %v1313 = vld [vmem:[%s232 + $0x28] sm:$0xff]
      %v1314 = vld [vmem:[%s232 + $0x30] sm:$0xff]
      %v1315 = vld [vmem:[%s232 + $0x38] sm:$0xff]
      %v1316 = vadd.f32 %v1308, %v1300
      %v1317 = vadd.f32 %v1309, %v1301
      %v1318 = vadd.f32 %v1310, %v1302
      %v1319 = vadd.f32 %v1311, %v1303
      %v1320 = vadd.f32 %v1312, %v1304
      %v1321 = vadd.f32 %v1313, %v1305
      %v1322 = vadd.f32 %v1314, %v1306
      %v1323 = vadd.f32 %v1315, %v1307
      %vm1324 = vcmask 261120
      %1325 = vst.msk [vmem:[%s232] sm:$0xff] %vm1324, %v1316
      %1326 = vst.msk [vmem:[%s232 + $0x8] sm:$0xff] %vm1324, %v1317
      %1327 = vst.msk [vmem:[%s232 + $0x10] sm:$0xff] %vm1324, %v1318
      %1328 = vst.msk [vmem:[%s232 + $0x18] sm:$0xff] %vm1324, %v1319
      %1329 = vst.msk [vmem:[%s232 + $0x20] sm:$0xff] %vm1324, %v1320
      %1330 = vst.msk [vmem:[%s232 + $0x28] sm:$0xff] %vm1324, %v1321
      %1331 = vst.msk [vmem:[%s232 + $0x30] sm:$0xff] %vm1324, %v1322
      %1332 = vst.msk [vmem:[%s232 + $0x38] sm:$0xff] %vm1324, %v1323
      %p1333 = scmp.lt.s32.totalorder %s19, 0
      %s1334 = scalar_select %p1333, %s19, 0
      %s1335 = smul.addr %s1334, 8
      %s1336 = scalar_lea.vmem %s4, %s1335
      // Predicated region
      $region41: #{gcn_forward.1} parent=35 // pred_check
        %p1337 = pneg %p141
      $region42: #{gcn_forward.1} parent=35 // pred_check_branch
        %1339 = sbr.rel (%p1337) target = $region44
      $region43: #{gcn_forward.1} parent=35 // pred_region
        _
      $region44: #{gcn_forward.1} parent=35 // pred_fallthru
        _
      // Predicated region
      $region45: #{gcn_forward.1} parent=35 // pred_check
        %p1340 = pneg %p141
      $region46: #{gcn_forward.1} parent=35 // pred_check_branch
        %1342 = sbr.rel (%p1340) target = $region48
      $region47: #{gcn_forward.1} parent=35 // pred_region
        %p1343 = scmp.lt.s32.totalorder %s19, 0
        %s1344 = scalar_select %p1343, %s19, 0
        %s1345 = smul.addr %s1344, 8
        %s1346 = scalar_lea.vmem %s4, %s1345
      $region48: #{gcn_forward.1} parent=35 // pred_fallthru
        _
    $region36: #{gcn_forward.1} parent=5 // pred_fallthru
      _
    %p1347 = scmp.le.s32.totalorder 2, %s10
    // Predicated region
    $region49: #{gcn_forward.1} parent=5 // pred_check
      %p1348 = pneg %p1347
    $region50: #{gcn_forward.1} parent=5 // pred_check_branch
      %1350 = sbr.rel (%p1348) target = $region52
    $region51: #{gcn_forward.1} parent=5 // pred_region
      %s1351 = ssub.s32 %s10, 2
    $region52: #{gcn_forward.1} parent=5 // pred_fallthru
      _
  $region6: #{gcn_forward.1} parent=0 // loop_footer
    %s14 = sadd.s32 1, %s10
  $region7: #{gcn_forward.1} parent=0 // loop_footer_branch
    %9 = sbr.rel target = $region3
  $region8: #{gcn_forward.1} parent=0 // loop_exit
    _

</llo_original>
